<compile_context>
chip_gen: v7x
topology: tpu7x:2x2x1
jax: 0.10.0
libtpu: 0.0.40
codegen_flags: <defaults>
</compile_context>

<pallas_src>
import random

import numpy as np
import jax
import jax.numpy as jnp
from jax import lax
from jax.experimental import pallas as pl
from jax.experimental.pallas import tpu as pltpu


# -----------------------------------------------------------------------------
# Synthetic parameters in PyTorch orientation (weight shape = (out, in))
# -----------------------------------------------------------------------------
def init_params(key, H, O, WORD_DIM):
    ks = jax.random.split(key, 16)

    def w(k, shape, scale=0.05):
        return jax.random.normal(k, shape, jnp.float32) * scale

    return dict(
        embedding=w(ks[0], (O, WORD_DIM), 1.0),          # nn.Embedding(output_size, 1024)
        att_l1_w=w(ks[1], (H, 2 * H)), att_l1_b=w(ks[2], (H,)),
        att_l2_w=w(ks[3], (H, H)),     att_l2_b=w(ks[4], (H,)),
        att_l3_w=w(ks[5], (H, H)),     att_l3_b=w(ks[6], (H,)),
        att_l4_w=w(ks[7], (H, H)),     att_l4_b=w(ks[8], (H,)),
        att_to_w=w(ks[9], (1, H)),                        # to_weight, no bias
        gru_w_ih=w(ks[10], (3 * H, WORD_DIM + H)),        # input = [word(1024) | context(H)]
        gru_b_ih=w(ks[11], (3 * H,)),
        gru_w_hh=w(ks[12], (3 * H, H)),
        gru_b_hh=w(ks[13], (3 * H,)),
        out_w=w(ks[14], (O, H)),
        out_b=w(ks[15], (O,)),
    )


def _expit(x):
    return 1.0 / (1.0 + np.exp(-x))


# -----------------------------------------------------------------------------
# Offline algebraic folding (host side, f32, HIGHEST precision)
# -----------------------------------------------------------------------------
def fold_params(params, H, WORD_DIM):
    hp = lax.Precision.HIGHEST
    w1t = params['att_l1_w'].T                     # (2H, H): rows [enc | hid]
    A_e, A_h = w1t[:H], w1t[H:]

    # score = x4 @ to_w.T ; fold linear4, linear3, linear2 and linear1 into it.
    u = params['att_to_w'].T.astype(jnp.float32)   # (H, 1)
    c = jnp.zeros((1,), jnp.float32)
    for wname, bname in (('att_l4_w', 'att_l4_b'),
                         ('att_l3_w', 'att_l3_b'),
                         ('att_l2_w', 'att_l2_b')):
        c = c + jnp.dot(params[bname], u, precision=hp)
        u = jnp.dot(params[wname].T, u, precision=hp)
    c = c + jnp.dot(params['att_l1_b'], u, precision=hp)
    v_e = jnp.dot(A_e, u, precision=hp).reshape(1, 1, H)
    v_h = jnp.dot(A_h, u, precision=hp).reshape(1, H)

    wih_t = params['gru_w_ih'].T                   # (WORD_DIM + H, 3H)
    gi_tbl = (jnp.dot(params['embedding'], wih_t[:WORD_DIM], precision=hp)
              + params['gru_b_ih'])                # (O, 3H): word path + b_ih, pre-folded

    return dict(
        v_e=v_e, v_h=v_h, c_att=float(c[0]),
        gi_tbl=gi_tbl,
        wih_c=wih_t[WORD_DIM:],                    # context part of W_ih (host-side only now)
        whh=params['gru_w_hh'].T,                  # (H, 3H)
        bhh=params['gru_b_hh'].reshape(1, 3 * H),
        wout=params['out_w'].T,                    # (H, O)
        bout=params['out_b'].reshape(1, -1),
    )


def to_kernel_fold(fold):
    """bf16 copies of the large resident matrices (f32 accumulation in-kernel)."""
    kf = dict(fold)
    for name in ('gi_tbl', 'whh', 'wout'):
        kf[name] = fold[name].astype(jnp.bfloat16)
    return kf


# -----------------------------------------------------------------------------
# Fused Pallas kernel: the whole decode recurrence, single grid step + pl.loop
# -----------------------------------------------------------------------------
def _build_fused_decoder(T_dec, B, H, O):
    f32 = jnp.float32
    bf16 = jnp.bfloat16

    def kernel(use_tf_ref,                                    # scalar prefetch (SMEM), (T_dec+1,)
               gi_ctx_ref, hid0_ref, gi_start_ref, tf_gi_ref,
               gi_tbl_ref, whh_ref, bhh_ref, wout_ref, bout_ref,
               logits_ref,
               hid_scr, fb_scr):
        # one-time init (single grid step, so no pl.when needed)
        hid_scr[...] = hid0_ref[...]                          # decoder_hidden <- encoder_hidden
        fb_scr[...] = gi_start_ref[...]                       # start token id = 1

        gi_ctx = gi_ctx_ref[...]                              # (B, 3H) step-invariant attention term
        bhh = bhh_ref[...]
        bout = bout_ref[...]
        # column-index iota for the argmax feedback, generated once (not per step)
        colf = lax.broadcasted_iota(jnp.int32, (B, O), 1).astype(f32)

        @pl.loop(0, T_dec)
        def _step(t):
            hid = hid_scr[...]                                # (B, H) f32

            # ---------------- teacher-forcing select (one vselect) ----------------
            tf_flag = jnp.full((B, 3 * H), use_tf_ref[t], jnp.int32)
            cur_gi = jnp.where(tf_flag == 1, tf_gi_ref[t].astype(f32), fb_scr[...])

            # ---------------- GRU cell (word + b_ih pre-folded, ctx pre-folded) ----------------
            gi = cur_gi + gi_ctx
            gh = jnp.dot(hid.astype(bf16), whh_ref[...],
                         preferred_element_type=f32) + bhh
            r = jax.nn.sigmoid(gi[:, 0 * H:1 * H] + gh[:, 0 * H:1 * H])
            z = jax.nn.sigmoid(gi[:, 1 * H:2 * H] + gh[:, 1 * H:2 * H])
            n = jnp.tanh(gi[:, 2 * H:3 * H] + r * gh[:, 2 * H:3 * H])
            h_new = (1.0 - z) * n + z * hid                   # (B, H)

            # ---------------- output projection ----------------
            logits = jnp.dot(h_new.astype(bf16), wout_ref[...],
                             preferred_element_type=f32) + bout        # (B, O)
            logits_ref[t] = logits
            hid_scr[...] = h_new

            # -------- greedy-feedback gather, only if the NEXT step consumes it --------
            # use_tf is padded with a trailing 1, so this is always skipped on the last step.
            @pl.when(use_tf_ref[t + 1] == 0)
            def _fb():
                mx = jnp.max(logits, axis=1, keepdims=True)
                # first index attaining the max (matches jnp.argmax tie-breaking)
                neg_best = jnp.max(jnp.where(logits == mx, -colf, -jnp.float32(O)),
                                   axis=1, keepdims=True)
                onehot = jnp.where(colf == -neg_best, 1.0, 0.0).astype(bf16)   # (B, O)
                # TODO(synk): at realistic vocab sizes replace this one-hot matmul with a
                # per-row dynamic row gather of gi_tbl and tile wout over a vocab grid axis.
                fb_scr[...] = jnp.dot(onehot, gi_tbl_ref[...],
                                      preferred_element_type=f32)              # (B, 3H)

    grid_spec = pltpu.PrefetchScalarGridSpec(
        num_scalar_prefetch=1,
        grid=(1,),
        in_specs=[
            pl.BlockSpec((B, 3 * H), lambda i, tf: (0, 0)),            # gi_ctx (f32)
            pl.BlockSpec((B, H), lambda i, tf: (0, 0)),                # initial hidden
            pl.BlockSpec((B, 3 * H), lambda i, tf: (0, 0)),            # gi row for start token
            pl.BlockSpec((T_dec, B, 3 * H), lambda i, tf: (0, 0, 0)),  # teacher-forced gi rows (bf16)
            pl.BlockSpec((O, 3 * H), lambda i, tf: (0, 0)),            # gi_tbl (bf16)
            pl.BlockSpec((H, 3 * H), lambda i, tf: (0, 0)),            # whh (bf16)
            pl.BlockSpec((1, 3 * H), lambda i, tf: (0, 0)),            # bhh
            pl.BlockSpec((H, O), lambda i, tf: (0, 0)),                # wout (bf16)
            pl.BlockSpec((1, O), lambda i, tf: (0, 0)),                # bout
        ],
        out_specs=pl.BlockSpec((T_dec, B, O), lambda i, tf: (0, 0, 0)),
        scratch_shapes=[
            pltpu.VMEM((B, H), jnp.float32),        # hidden-state carry
            pltpu.VMEM((B, 3 * H), jnp.float32),    # feedback gi-row carry
        ],
    )

    return jax.jit(pl.pallas_call(
        kernel,
        grid_spec=grid_spec,
        out_shape=jax.ShapeDtypeStruct((T_dec, B, O), jnp.float32),
        compiler_params=pltpu.CompilerParams(
            dimension_semantics=("arbitrary",),     # serial recurrence lives inside one step
            vmem_limit_bytes=32 * 1024 * 1024),
    ))


# -----------------------------------------------------------------------------
# Shared host-side preparation (fold, attention hoist, TF draws, batch padding)
# -----------------------------------------------------------------------------
def _prepare(params, encoder_hidden, encoder_output, targets, training_steps, rng_seed):
    _, B_real, H = encoder_hidden.shape
    _, S, _ = encoder_output.shape
    O, WORD_DIM = params['embedding'].shape
    T = targets.shape[1]
    T_dec = T - 1
    B_pad = max(8, ((B_real + 7) // 8) * 8)

    fold = fold_params(params, H, WORD_DIM)
    kfold = to_kernel_fold(fold)

    # teacher-forcing decisions: one Python random draw per step, like the original.
    # Padded by one trailing 1 so the kernel never computes feedback after the last step.
    threshold = _expit(training_steps / 20.0 + 0.85)
    rng = random.Random(rng_seed)
    use_tf = np.ones((T_dec + 1,), dtype=np.int32)
    for t in range(T_dec):
        use_tf[t] = 1 if rng.uniform(0.05, 0.995) > threshold else 0

    # pad batch to a full sublane (8); padded rows are independent garbage
    enc_pad = jnp.zeros((B_pad, S, H), jnp.float32).at[:B_real].set(encoder_output)
    hid0_pad = jnp.zeros((B_pad, H), jnp.float32).at[:B_real].set(encoder_hidden[0])
    targets_pad = jnp.zeros((B_pad, T), jnp.int32).at[:B_real].set(targets)

    # ---- attention hoist: the affine attention's hid@v_h term is a per-row constant
    # over S and softmax is shift-invariant, so the context is step-invariant.
    hp = lax.Precision.HIGHEST
    e_sc = jnp.einsum('bsh,h->bs', enc_pad, fold['v_e'].reshape(-1), precision=hp)
    attn_w = jax.nn.softmax(e_sc, axis=1)
    ctext = jnp.einsum('bs,bsh->bh', attn_w, enc_pad, precision=hp)            # (B_pad, H)
    gi_ctx = jnp.dot(ctext, fold['wih_c'], precision=hp)                       # (B_pad, 3H)

    gi_tbl_f32 = kfold['gi_tbl'].astype(jnp.float32)           # bf16-rounded table, widened
    # bf16 is lossless here (rows already bf16-rounded); halves the per-call DMA.
    tf_gi = jnp.transpose(kfold['gi_tbl'][targets_pad[:, :T_dec]], (1, 0, 2))  # (T_dec, B_pad, 3H) bf16
    gi_start = jnp.broadcast_to(gi_tbl_f32[1], (B_pad, 3 * H)) + 0.0           # start token = 1

    return dict(B_real=B_real, B_pad=B_pad, S=S, H=H, O=O, T_dec=T_dec,
                fold=fold, kfold=kfold, use_tf=jnp.asarray(use_tf),
                gi_ctx=gi_ctx, hid0=hid0_pad, tf_gi=tf_gi, gi_start=gi_start)


# -----------------------------------------------------------------------------
# Decoder.forward (training mode) using the fused Pallas kernel
# -----------------------------------------------------------------------------
def decoder_forward(params, encoder_hidden, encoder_output, targets,
                    training_steps, rng_seed=0):
    prep = _prepare(params, encoder_hidden, encoder_output, targets,
                    training_steps, rng_seed)
    kf = prep['kfold']
    fused = _build_fused_decoder(prep['T_dec'], prep['B_pad'], prep['H'], prep['O'])
    logits = fused(prep['use_tf'],
                   prep['gi_ctx'], prep['hid0'], prep['gi_start'], prep['tf_gi'],
                   kf['gi_tbl'], kf['whh'], kf['bhh'], kf['wout'], kf['bout'])
    log_probs = jnp.transpose(logits, (1, 0, 2))[:prep['B_real']]   # (B, T-1, O) raw logits
    predictions = jnp.argmax(log_probs, axis=2)
    return log_probs, predictions


# -----------------------------------------------------------------------------
# Pure-JAX reference that mirrors the fused kernel's math exactly
# -----------------------------------------------------------------------------
def reference_forward(params, encoder_hidden, encoder_output, targets,
                      training_steps, rng_seed=0):
    prep = _prepare(params, encoder_hidden, encoder_output, targets,
                    training_steps, rng_seed)
    kf = prep['kfold']
    f32, bf16 = jnp.float32, jnp.bfloat16
    H = prep['H']
    gi_tbl_f32 = kf['gi_tbl'].astype(f32)
    use_tf = np.asarray(prep['use_tf'])

    hid = prep['hid0']
    fb = prep['gi_start']
    gi_ctx = prep['gi_ctx']
    outs = []
    for t in range(prep['T_dec']):
        tf_row = prep['tf_gi'][t].astype(f32)
        cur_gi = tf_row if use_tf[t] == 1 else fb
        gi = cur_gi + gi_ctx
        gh = jnp.dot(hid.astype(bf16), kf['whh'], preferred_element_type=f32) + kf['bhh']
        r = jax.nn.sigmoid(gi[:, :H] + gh[:, :H])
        z = jax.nn.sigmoid(gi[:, H:2 * H] + gh[:, H:2 * H])
        n = jnp.tanh(gi[:, 2 * H:] + r * gh[:, 2 * H:])
        h_new = (1.0 - z) * n + z * hid

        logits = jnp.dot(h_new.astype(bf16), kf['wout'], preferred_element_type=f32) + kf['bout']
        outs.append(logits)

        tok = jnp.argmax(logits, axis=1)
        fb = gi_tbl_f32[tok]
        hid = h_new

    log_probs = jnp.stack(outs, axis=1)[:prep['B_real']]
    predictions = jnp.argmax(log_probs, axis=2)
    return log_probs, predictions


# -----------------------------------------------------------------------------
# Fold-fidelity check: original unfused math vs folded+hoisted math (one step, f32)
# -----------------------------------------------------------------------------
def _unfused_step(params, enc, hid, tok, H):
    hp = lax.Precision.HIGHEST
    B, S, _ = enc.shape
    cur = params['embedding'][tok]
    hid_rep = jnp.broadcast_to(hid[:, None, :], (B, S, H))
    mi = jnp.concatenate([enc, hid_rep], axis=2).reshape(-1, 2 * H)
    x = jnp.dot(mi, params['att_l1_w'].T, precision=hp) + params['att_l1_b']
    x = jnp.dot(x, params['att_l2_w'].T, precision=hp) + params['att_l2_b']
    x = jnp.dot(x, params['att_l3_w'].T, precision=hp) + params['att_l3_b']
    x = jnp.dot(x, params['att_l4_w'].T, precision=hp) + params['att_l4_b']
    score = jnp.dot(x, params['att_to_w'].T, precision=hp).reshape(B, S)
    w = jax.nn.softmax(score, axis=1)
    ctext = jnp.einsum('bs,bsh->bh', w, enc, precision=hp)
    gru_in = jnp.concatenate([cur, ctext], axis=1)
    gi = jnp.dot(gru_in, params['gru_w_ih'].T, precision=hp) + params['gru_b_ih']
    gh = jnp.dot(hid, params['gru_w_hh'].T, precision=hp) + params['gru_b_hh']
    r = jax.nn.sigmoid(gi[:, :H] + gh[:, :H])
    z = jax.nn.sigmoid(gi[:, H:2 * H] + gh[:, H:2 * H])
    n = jnp.tanh(gi[:, 2 * H:] + r * gh[:, 2 * H:])
    h_new = (1.0 - z) * n + z * hid
    logits = jnp.dot(h_new, params['out_w'].T, precision=hp) + params['out_b']
    return logits, h_new


def _folded_step_f32(fold, enc, hid, tok, H):
    hp = lax.Precision.HIGHEST
    # hoisted attention: hid@v_h and the affine bias are per-row constants over S,
    # so softmax(score) == softmax(enc@v_e) and ctext is independent of hid.
    e_sc = jnp.sum(enc * fold['v_e'], axis=2)
    w = jax.nn.softmax(e_sc, axis=1)
    ctext = jnp.sum(w[:, :, None] * enc, axis=1)
    gi = fold['gi_tbl'][tok] + jnp.dot(ctext, fold['wih_c'], precision=hp)
    gh = jnp.dot(hid, fold['whh'], precision=hp) + fold['bhh']
    r = jax.nn.sigmoid(gi[:, :H] + gh[:, :H])
    z = jax.nn.sigmoid(gi[:, H:2 * H] + gh[:, H:2 * H])
    n = jnp.tanh(gi[:, 2 * H:] + r * gh[:, 2 * H:])
    h_new = (1.0 - z) * n + z * hid
    logits = jnp.dot(h_new, fold['wout'], precision=hp) + fold['bout']
    return logits, h_new


# -----------------------------------------------------------------------------
if __name__ == "__main__":
    # hidden_size=128, output_size=vocab=256, word_dim=1024 (hard-coded in module)
    H, O, WORD_DIM = 128, 256, 1024
    B, S_ENC, T = 2, 8, 5
    TRAIN_STEPS = 10

    key = jax.random.PRNGKey(0)
    kp, kh, ke, kt, kv = jax.random.split(key, 5)
    params = init_params(kp, H, O, WORD_DIM)
    encoder_hidden = jax.random.normal(kh, (1, B, H), jnp.float32) * 0.5
    encoder_output = jax.random.normal(ke, (B, S_ENC, H), jnp.float32)
    targets = jax.random.randint(kt, (B, T), 0, O, dtype=jnp.int32)

    # --- check 1: offline affine folding + attention hoist match the original math ---
    fold = fold_params(params, H, WORD_DIM)
    tok0 = jax.random.randint(kv, (B,), 0, O, dtype=jnp.int32)
    hid0 = encoder_hidden[0]
    lp_u, h_u = _unfused_step(params, encoder_output, hid0, tok0, H)
    lp_f, h_f = _folded_step_f32(fold, encoder_output, hid0, tok0, H)
    np.testing.assert_allclose(np.asarray(lp_f), np.asarray(lp_u), atol=1e-3, rtol=1e-3)
    np.testing.assert_allclose(np.asarray(h_f), np.asarray(h_u), atol=1e-3, rtol=1e-3)

    # --- check 2: fused Pallas decode vs mirrored pure-JAX reference ---
    log_probs, predictions = decoder_forward(
        params, encoder_hidden, encoder_output, targets, TRAIN_STEPS)
    log_probs = jax.block_until_ready(log_probs)
    predictions = jax.block_until_ready(predictions)

    ref_lp, ref_pred = reference_forward(
        params, encoder_hidden, encoder_output, targets, TRAIN_STEPS)

    assert log_probs.shape == (B, T - 1, O)
    assert predictions.shape == (B, T - 1)
    np.testing.assert_allclose(np.asarray(log_probs), np.asarray(ref_lp),
                               atol=1e-2, rtol=1e-2)
    print("KERNEL_OK")
</pallas_src>

<mosaic_0001>
module attributes {stable_mosaic.version = 11 : i64} {
  func.func @kernel(%arg0: i32, %arg1: memref<5xi32, #tpu.memory_space<smem>>, %arg2: memref<8x384xf32, #tpu.memory_space<vmem>>, %arg3: memref<8x128xf32, #tpu.memory_space<vmem>>, %arg4: memref<8x384xf32, #tpu.memory_space<vmem>>, %arg5: memref<4x8x384xbf16, #tpu.memory_space<vmem>>, %arg6: memref<256x384xbf16, #tpu.memory_space<vmem>>, %arg7: memref<128x384xbf16, #tpu.memory_space<vmem>>, %arg8: memref<1x384xf32, #tpu.memory_space<vmem>>, %arg9: memref<128x256xbf16, #tpu.memory_space<vmem>>, %arg10: memref<1x256xf32, #tpu.memory_space<vmem>>, %arg11: memref<4x8x256xf32, #tpu.memory_space<vmem>>, %arg12: memref<8x128xf32, #tpu.memory_space<vmem>>, %arg13: memref<8x384xf32, #tpu.memory_space<vmem>>) attributes {dimension_semantics = [#tpu.dimension_semantics<arbitrary>], iteration_bounds = array<i64: 1>, scalar_prefetch = 1 : i64, scratch_operands = 2 : i64, tpu.core_type = #tpu.core_type<tc>, window_params = [{pipeline_mode = #tpu.pipeline_mode<synchronous>, transform_indices = @transform_0, window_bounds = array<i64: 8, 384>}, {pipeline_mode = #tpu.pipeline_mode<synchronous>, transform_indices = @transform_1, window_bounds = array<i64: 8, 128>}, {pipeline_mode = #tpu.pipeline_mode<synchronous>, transform_indices = @transform_2, window_bounds = array<i64: 8, 384>}, {pipeline_mode = #tpu.pipeline_mode<synchronous>, transform_indices = @transform_3, window_bounds = array<i64: 4, 8, 384>}, {pipeline_mode = #tpu.pipeline_mode<synchronous>, transform_indices = @transform_4, window_bounds = array<i64: 256, 384>}, {pipeline_mode = #tpu.pipeline_mode<synchronous>, transform_indices = @transform_5, window_bounds = array<i64: 128, 384>}, {pipeline_mode = #tpu.pipeline_mode<synchronous>, transform_indices = @transform_6, window_bounds = array<i64: 1, 384>}, {pipeline_mode = #tpu.pipeline_mode<synchronous>, transform_indices = @transform_7, window_bounds = array<i64: 128, 256>}, {pipeline_mode = #tpu.pipeline_mode<synchronous>, transform_indices = @transform_8, window_bounds = array<i64: 1, 256>}, {pipeline_mode = #tpu.pipeline_mode<synchronous>, transform_indices = @transform_9, window_bounds = array<i64: 4, 8, 256>}]} {
    %c0 = arith.constant 0 : index
    %c0_0 = arith.constant 0 : index
    %0 = vector.load %arg3[%c0, %c0_0] : memref<8x128xf32, #tpu.memory_space<vmem>>, vector<8x128xf32>
    %c0_1 = arith.constant 0 : index
    %c0_2 = arith.constant 0 : index
    %1 = vector.load %arg12[%c0_1, %c0_2] : memref<8x128xf32, #tpu.memory_space<vmem>>, vector<8x128xf32>
    tpu.vector_store %arg12[%c0_1, %c0_2], %0 {strides = array<i32>} : memref<8x128xf32, #tpu.memory_space<vmem>>, vector<8x128xf32>,
    %c0_3 = arith.constant 0 : index
    %c0_4 = arith.constant 0 : index
    %2 = vector.load %arg4[%c0_3, %c0_4] : memref<8x384xf32, #tpu.memory_space<vmem>>, vector<8x384xf32>
    %c0_5 = arith.constant 0 : index
    %c0_6 = arith.constant 0 : index
    %3 = vector.load %arg13[%c0_5, %c0_6] : memref<8x384xf32, #tpu.memory_space<vmem>>, vector<8x384xf32>
    tpu.vector_store %arg13[%c0_5, %c0_6], %2 {strides = array<i32>} : memref<8x384xf32, #tpu.memory_space<vmem>>, vector<8x384xf32>,
    %c0_7 = arith.constant 0 : index
    %c0_8 = arith.constant 0 : index
    %4 = vector.load %arg2[%c0_7, %c0_8] : memref<8x384xf32, #tpu.memory_space<vmem>>, vector<8x384xf32>
    %c0_9 = arith.constant 0 : index
    %c0_10 = arith.constant 0 : index
    %5 = vector.load %arg8[%c0_9, %c0_10] : memref<1x384xf32, #tpu.memory_space<vmem>>, vector<1x384xf32>
    %c0_11 = arith.constant 0 : index
    %c0_12 = arith.constant 0 : index
    %6 = vector.load %arg10[%c0_11, %c0_12] : memref<1x256xf32, #tpu.memory_space<vmem>>, vector<1x256xf32>
    %7 = tpu.iota {dimensions = array<i32: 1>} : vector<8x256xi32>
    %8 = arith.sitofp %7 : vector<8x256xi32> to vector<8x256xf32>
    %c0_i32 = arith.constant 0 : i32
    %c4_i32 = arith.constant 4 : i32
    %9 = arith.addi %c0_i32, %c4_i32 : i32
    %c1_i32 = arith.constant 1 : i32
    scf.for %arg14 = %c0_i32 to %9 step %c1_i32  : i32 {
      %c1_i32_14 = arith.constant 1 : i32
      %10 = arith.muli %arg14, %c1_i32_14 : i32
      %c0_i32_15 = arith.constant 0 : i32
      %11 = arith.addi %c0_i32_15, %10 : i32
      %c0_16 = arith.constant 0 : index
      %c0_17 = arith.constant 0 : index
      %12 = vector.load %arg12[%c0_16, %c0_17] : memref<8x128xf32, #tpu.memory_space<vmem>>, vector<8x128xf32>
      %13 = arith.index_cast %11 : i32 to index
      %14 = memref.load %arg1[%13] : memref<5xi32, #tpu.memory_space<smem>>
      %15 = vector.broadcast %14 : i32 to vector<8x384xi32>
      %c1_i32_18 = arith.constant 1 : i32
      %16 = vector.broadcast %c1_i32_18 : i32 to vector<8x384xi32>
      %17 = arith.cmpi eq, %15, %16 : vector<8x384xi32>
      %18 = arith.index_cast %11 : i32 to index
      %c0_19 = arith.constant 0 : index
      %c0_20 = arith.constant 0 : index
      %19 = vector.load %arg5[%18, %c0_19, %c0_20] : memref<4x8x384xbf16, #tpu.memory_space<vmem>>, vector<1x8x384xbf16>
      %20 = vector.shape_cast %19 : vector<1x8x384xbf16> to vector<8x384xbf16>
      %21 = arith.extf %20 : vector<8x384xbf16> to vector<8x384xf32>
      %c0_21 = arith.constant 0 : index
      %c0_22 = arith.constant 0 : index
      %22 = vector.load %arg13[%c0_21, %c0_22] : memref<8x384xf32, #tpu.memory_space<vmem>>, vector<8x384xf32>
      %23 = arith.select %17, %21, %22 : vector<8x384xi1>, vector<8x384xf32>
      %24 = arith.addf %23, %4 : vector<8x384xf32>
      %25 = arith.truncf %12 : vector<8x128xf32> to vector<8x128xbf16>
      %c0_23 = arith.constant 0 : index
      %c0_24 = arith.constant 0 : index
      %26 = vector.load %arg7[%c0_23, %c0_24] : memref<128x384xbf16, #tpu.memory_space<vmem>>, vector<128x384xbf16>
      %cst = arith.constant dense<0.000000e+00> : vector<8x384xf32>
      %27 = tpu.matmul %25, %26, %cst {dimension_numbers = #tpu.dot_dimension_numbers<[1], [0], [0], [1], [0, 0, 1, 1], [], []>} : vector<8x128xbf16>, vector<128x384xbf16>, vector<8x384xf32> -> vector<8x384xf32>
      %28 = vector.broadcast %5 : vector<1x384xf32> to vector<8x384xf32>
      %29 = arith.addf %27, %28 : vector<8x384xf32>
      %30 = vector.extract_strided_slice %24 {offsets = [0, 0], sizes = [8, 128], strides = [1, 1]} : vector<8x384xf32> to vector<8x128xf32>
      %31 = vector.extract_strided_slice %29 {offsets = [0, 0], sizes = [8, 128], strides = [1, 1]} : vector<8x384xf32> to vector<8x128xf32>
      %32 = arith.addf %30, %31 : vector<8x128xf32>
      %33 = arith.negf %32 : vector<8x128xf32>
      %34 = math.exp %33 : vector<8x128xf32>
      %cst_25 = arith.constant 1.000000e+00 : f32
      %35 = vector.broadcast %cst_25 : f32 to vector<8x128xf32>
      %36 = arith.addf %35, %34 : vector<8x128xf32>
      %37 = arith.divf %35, %36 : vector<8x128xf32>
      %38 = vector.extract_strided_slice %24 {offsets = [0, 128], sizes = [8, 128], strides = [1, 1]} : vector<8x384xf32> to vector<8x128xf32>
      %39 = vector.extract_strided_slice %29 {offsets = [0, 128], sizes = [8, 128], strides = [1, 1]} : vector<8x384xf32> to vector<8x128xf32>
      %40 = arith.addf %38, %39 : vector<8x128xf32>
      %41 = arith.negf %40 : vector<8x128xf32>
      %42 = math.exp %41 : vector<8x128xf32>
      %cst_26 = arith.constant 1.000000e+00 : f32
      %43 = vector.broadcast %cst_26 : f32 to vector<8x128xf32>
      %44 = arith.addf %43, %42 : vector<8x128xf32>
      %45 = arith.divf %43, %44 : vector<8x128xf32>
      %46 = vector.extract_strided_slice %24 {offsets = [0, 256], sizes = [8, 128], strides = [1, 1]} : vector<8x384xf32> to vector<8x128xf32>
      %47 = vector.extract_strided_slice %29 {offsets = [0, 256], sizes = [8, 128], strides = [1, 1]} : vector<8x384xf32> to vector<8x128xf32>
      %48 = arith.mulf %37, %47 : vector<8x128xf32>
      %49 = arith.addf %46, %48 : vector<8x128xf32>
      %50 = math.tanh %49 : vector<8x128xf32>
      %cst_27 = arith.constant 1.000000e+00 : f32
      %51 = vector.broadcast %cst_27 : f32 to vector<8x128xf32>
      %52 = arith.subf %51, %45 : vector<8x128xf32>
      %53 = arith.mulf %52, %50 : vector<8x128xf32>
      %54 = arith.mulf %45, %12 : vector<8x128xf32>
      %55 = arith.addf %53, %54 : vector<8x128xf32>
      %56 = arith.truncf %55 : vector<8x128xf32> to vector<8x128xbf16>
      %c0_28 = arith.constant 0 : index
      %c0_29 = arith.constant 0 : index
      %57 = vector.load %arg9[%c0_28, %c0_29] : memref<128x256xbf16, #tpu.memory_space<vmem>>, vector<128x256xbf16>
      %cst_30 = arith.constant dense<0.000000e+00> : vector<8x256xf32>
      %58 = tpu.matmul %56, %57, %cst_30 {dimension_numbers = #tpu.dot_dimension_numbers<[1], [0], [0], [1], [0, 0, 1, 1], [], []>} : vector<8x128xbf16>, vector<128x256xbf16>, vector<8x256xf32> -> vector<8x256xf32>
      %59 = vector.broadcast %6 : vector<1x256xf32> to vector<8x256xf32>
      %60 = arith.addf %58, %59 : vector<8x256xf32>
      %61 = arith.index_cast %11 : i32 to index
      %c0_31 = arith.constant 0 : index
      %c0_32 = arith.constant 0 : index
      %62 = vector.load %arg11[%61, %c0_31, %c0_32] : memref<4x8x256xf32, #tpu.memory_space<vmem>>, vector<1x8x256xf32>
      %63 = vector.shape_cast %62 : vector<1x8x256xf32> to vector<8x256xf32>
      %64 = vector.shape_cast %60 : vector<8x256xf32> to vector<1x8x256xf32>
      tpu.vector_store %arg11[%61, %c0_31, %c0_32], %64 {strides = array<i32>} : memref<4x8x256xf32, #tpu.memory_space<vmem>>, vector<1x8x256xf32>,
      %c0_33 = arith.constant 0 : index
      %c0_34 = arith.constant 0 : index
      %65 = vector.load %arg12[%c0_33, %c0_34] : memref<8x128xf32, #tpu.memory_space<vmem>>, vector<8x128xf32>
      tpu.vector_store %arg12[%c0_33, %c0_34], %55 {strides = array<i32>} : memref<8x128xf32, #tpu.memory_space<vmem>>, vector<8x128xf32>,
      %c1_i32_35 = arith.constant 1 : i32
      %66 = arith.addi %11, %c1_i32_35 : i32
      %67 = arith.index_cast %66 : i32 to index
      %68 = memref.load %arg1[%67] : memref<5xi32, #tpu.memory_space<smem>>
      %c0_i32_36 = arith.constant 0 : i32
      %69 = arith.cmpi eq, %68, %c0_i32_36 : i32
      %70 = arith.extui %69 : i1 to i32
      %c0_i32_37 = arith.constant 0 : i32
      %71 = arith.cmpi ne, %70, %c0_i32_37 : i32
      scf.if %71 {
        %cst_38 = arith.constant dense<0xFF800000> : vector<8xf32>
        %72 = vector.multi_reduction <maximumf>, %60, %cst_38 [1] : vector<8x256xf32> to vector<8xf32>
        %73 = vector.shape_cast %72 : vector<8xf32> to vector<8x1xf32>
        %74 = vector.broadcast %73 : vector<8x1xf32> to vector<8x256xf32>
        %75 = arith.cmpf oeq, %60, %74 : vector<8x256xf32>
        %cst_39 = arith.constant 0.000000e+00 : f32
        %76 = vector.broadcast %cst_39 : f32 to vector<8x256xf32>
        %77 = arith.subf %76, %8 : vector<8x256xf32>
        %cst_40 = arith.constant 0.000000e+00 : f32
        %cst_41 = arith.constant 2.560000e+02 : f32
        %78 = arith.subf %cst_40, %cst_41 : f32
        %79 = vector.broadcast %78 : f32 to vector<8x256xf32>
        %80 = arith.select %75, %77, %79 : vector<8x256xi1>, vector<8x256xf32>
        %cst_42 = arith.constant dense<0xFF800000> : vector<8xf32>
        %81 = vector.multi_reduction <maximumf>, %80, %cst_42 [1] : vector<8x256xf32> to vector<8xf32>
        %82 = vector.shape_cast %81 : vector<8xf32> to vector<8x1xf32>
        %cst_43 = arith.constant 0.000000e+00 : f32
        %83 = vector.broadcast %cst_43 : f32 to vector<8x1xf32>
        %84 = arith.subf %83, %82 : vector<8x1xf32>
        %85 = vector.broadcast %84 : vector<8x1xf32> to vector<8x256xf32>
        %86 = arith.cmpf oeq, %8, %85 : vector<8x256xf32>
        %cst_44 = arith.constant 1.000000e+00 : f32
        %cst_45 = arith.constant 0.000000e+00 : f32
        %87 = vector.broadcast %cst_44 : f32 to vector<8x256xf32>
        %88 = vector.broadcast %cst_45 : f32 to vector<8x256xf32>
        %89 = arith.select %86, %87, %88 : vector<8x256xi1>, vector<8x256xf32>
        %90 = arith.truncf %89 : vector<8x256xf32> to vector<8x256xbf16>
        %c0_46 = arith.constant 0 : index
        %c0_47 = arith.constant 0 : index
        %91 = vector.load %arg6[%c0_46, %c0_47] : memref<256x384xbf16, #tpu.memory_space<vmem>>, vector<256x384xbf16>
        %cst_48 = arith.constant dense<0.000000e+00> : vector<8x384xf32>
        %92 = tpu.matmul %90, %91, %cst_48 {dimension_numbers = #tpu.dot_dimension_numbers<[1], [0], [0], [1], [0, 0, 1, 1], [], []>} : vector<8x256xbf16>, vector<256x384xbf16>, vector<8x384xf32> -> vector<8x384xf32>
        %c0_49 = arith.constant 0 : index
        %c0_50 = arith.constant 0 : index
        %93 = vector.load %arg13[%c0_49, %c0_50] : memref<8x384xf32, #tpu.memory_space<vmem>>, vector<8x384xf32>
        tpu.vector_store %arg13[%c0_49, %c0_50], %92 {strides = array<i32>} : memref<8x384xf32, #tpu.memory_space<vmem>>, vector<8x384xf32>,
      } else {
      }
    }
    %c4_i32_13 = arith.constant 4 : i32
    return
  }
  func.func @transform_0(%arg0: i32, %arg1: memref<5xi32, #tpu.memory_space<smem>>) -> (i32, i32) {
    %c0_i32 = arith.constant 0 : i32
    %c0_i32_0 = arith.constant 0 : i32
    %c0_i32_1 = arith.constant 0 : i32
    return %c0_i32, %c0_i32_0 : i32, i32
  }
  func.func @transform_1(%arg0: i32, %arg1: memref<5xi32, #tpu.memory_space<smem>>) -> (i32, i32) {
    %c0_i32 = arith.constant 0 : i32
    %c0_i32_0 = arith.constant 0 : i32
    %c0_i32_1 = arith.constant 0 : i32
    return %c0_i32, %c0_i32_0 : i32, i32
  }
  func.func @transform_2(%arg0: i32, %arg1: memref<5xi32, #tpu.memory_space<smem>>) -> (i32, i32) {
    %c0_i32 = arith.constant 0 : i32
    %c0_i32_0 = arith.constant 0 : i32
    %c0_i32_1 = arith.constant 0 : i32
    return %c0_i32, %c0_i32_0 : i32, i32
  }
  func.func @transform_3(%arg0: i32, %arg1: memref<5xi32, #tpu.memory_space<smem>>) -> (i32, i32, i32) {
    %c0_i32 = arith.constant 0 : i32
    %c0_i32_0 = arith.constant 0 : i32
    %c0_i32_1 = arith.constant 0 : i32
    %c0_i32_2 = arith.constant 0 : i32
    return %c0_i32, %c0_i32_0, %c0_i32_1 : i32, i32, i32
  }
  func.func @transform_4(%arg0: i32, %arg1: memref<5xi32, #tpu.memory_space<smem>>) -> (i32, i32) {
    %c0_i32 = arith.constant 0 : i32
    %c0_i32_0 = arith.constant 0 : i32
    %c0_i32_1 = arith.constant 0 : i32
    return %c0_i32, %c0_i32_0 : i32, i32
  }
  func.func @transform_5(%arg0: i32, %arg1: memref<5xi32, #tpu.memory_space<smem>>) -> (i32, i32) {
    %c0_i32 = arith.constant 0 : i32
    %c0_i32_0 = arith.constant 0 : i32
    %c0_i32_1 = arith.constant 0 : i32
    return %c0_i32, %c0_i32_0 : i32, i32
  }
  func.func @transform_6(%arg0: i32, %arg1: memref<5xi32, #tpu.memory_space<smem>>) -> (i32, i32) {
    %c0_i32 = arith.constant 0 : i32
    %c0_i32_0 = arith.constant 0 : i32
    %c0_i32_1 = arith.constant 0 : i32
    return %c0_i32, %c0_i32_0 : i32, i32
  }
  func.func @transform_7(%arg0: i32, %arg1: memref<5xi32, #tpu.memory_space<smem>>) -> (i32, i32) {
    %c0_i32 = arith.constant 0 : i32
    %c0_i32_0 = arith.constant 0 : i32
    %c0_i32_1 = arith.constant 0 : i32
    return %c0_i32, %c0_i32_0 : i32, i32
  }
  func.func @transform_8(%arg0: i32, %arg1: memref<5xi32, #tpu.memory_space<smem>>) -> (i32, i32) {
    %c0_i32 = arith.constant 0 : i32
    %c0_i32_0 = arith.constant 0 : i32
    %c0_i32_1 = arith.constant 0 : i32
    return %c0_i32, %c0_i32_0 : i32, i32
  }
  func.func @transform_9(%arg0: i32, %arg1: memref<5xi32, #tpu.memory_space<smem>>) -> (i32, i32, i32) {
    %c0_i32 = arith.constant 0 : i32
    %c0_i32_0 = arith.constant 0 : i32
    %c0_i32_1 = arith.constant 0 : i32
    %c0_i32_2 = arith.constant 0 : i32
    return %c0_i32, %c0_i32_0, %c0_i32_1 : i32, i32, i32
  }
}

</mosaic_0001>

<llo_original>
// kernel: tpu_custom_call.1
$region0: #{tpu_custom_call.1}
  #allocation0 [shape = 'u32[]', space=smem, size = 0x4, offset = 0x4, fixed_abs, tag = 'smem constant byte address 0x4 - core index']
  #allocation1 [shape = 'u32[144,128]{1,0:T(1,128)}', space=vmem, size = 0x12000, scoped, tag = 'internal scratch']
  #allocation2 [shape = 'f32[8,128]{1,0:T(8,128)}', space=vmem, size = 0x1000, scoped, tag = 'scratch operand']
  #allocation3 [shape = 'f32[8,384]{1,0:T(8,128)}', space=vmem, size = 0x3000, scoped, tag = 'scratch operand']
  #allocation4 [shape = 's32[1]{0}', space=sflag, size = 0x4, scoped, tag = 'scoped memory for tpu_custom_call.1']
  #allocation5 [shape = 'u8[512]{0}', space=smem, size = 0x200, scoped, tag = 'prefetched SMEM operand 0']
  %s0 = inlined_call_operand.hbm [shape: s32[5], index: 0, kind: input, shape index: {}]
  %s1 = inlined_call_operand.hbm [shape: f32[8,384], index: 1, kind: input, shape index: {}]
  %s2 = inlined_call_operand.hbm [shape: f32[8,128], index: 2, kind: input, shape index: {}]
  %s3 = inlined_call_operand.hbm [shape: f32[8,384], index: 3, kind: input, shape index: {}]
  %s4 = inlined_call_operand.hbm [shape: bf16[4,8,384], index: 4, kind: input, shape index: {}]
  %s5 = inlined_call_operand.hbm [shape: bf16[256,384], index: 5, kind: input, shape index: {}]
  %s6 = inlined_call_operand.hbm [shape: bf16[128,384], index: 6, kind: input, shape index: {}]
  %s7 = inlined_call_operand.vmem [shape: f32[1,384], index: 7, kind: input, shape index: {}]
  %s8 = inlined_call_operand.hbm [shape: bf16[128,256], index: 8, kind: input, shape index: {}]
  %s9 = inlined_call_operand.vmem [shape: f32[1,256], index: 9, kind: input, shape index: {}]
  %s10 = inlined_call_operand.hbm [shape: f32[4,8,256], index: 10, kind: output, shape index: {}]
  %s11 = sld [smem:[#allocation0]]
  $region85: #{tpu_custom_call.1} parent=0
    _
  %s13 = ssub.s32 1, %s11
  %s14 = scalar_select 0, %s13, %s11
  %16 = dma.hbm_to_smem %s0, 16, [#allocation5], [#allocation4]
  %17 = dma.done [#allocation4], 16
  %18 = sfence
  $region1: #{tpu_custom_call.1} parent=0
    #allocation6 [shape = 'u8[12288]{0}', space=vmem, size = 0x3000, scoped, tag = 'input window, operand 1, single buffered']
    #allocation7 [shape = 's32[1]{0}', space=sflag, size = 0x4, scoped, tag = 'scoped memory for tpu_custom_call.1']
    #allocation8 [shape = 's32[1]{0}', space=sflag, size = 0x4, scoped, tag = 'scoped memory for tpu_custom_call.1']
    #allocation9 [shape = 'u8[4096]{0}', space=vmem, size = 0x1000, scoped, tag = 'input window, operand 2, single buffered']
    #allocation10 [shape = 's32[1]{0}', space=sflag, size = 0x4, scoped, tag = 'scoped memory for tpu_custom_call.1']
    #allocation11 [shape = 'u8[12288]{0}', space=vmem, size = 0x3000, scoped, tag = 'input window, operand 3, single buffered']
    #allocation12 [shape = 'u8[24576]{0}', space=vmem, size = 0x6000, scoped, tag = 'input window, operand 4, single buffered']
    #allocation13 [shape = 's32[1]{0}', space=sflag, size = 0x4, scoped, tag = 'scoped memory for tpu_custom_call.1']
    #allocation14 [shape = 'u8[196608]{0}', space=vmem, size = 0x30000, scoped, tag = 'input window, operand 5, single buffered']
    #allocation15 [shape = 'u8[98304]{0}', space=vmem, size = 0x18000, scoped, tag = 'input window, operand 6, single buffered']
    #allocation16 [shape = 's32[1]{0}', space=sflag, size = 0x4, scoped, tag = 'scoped memory for tpu_custom_call.1']
    #allocation17 [shape = 'u8[65536]{0}', space=vmem, size = 0x10000, scoped, tag = 'input window, operand 8, single buffered']
    #allocation18 [shape = 'u8[32768]{0}', space=vmem, size = 0x8000, scoped, tag = 'output window, operand 0, single buffered']
    %19 = vsyncpa [#allocation7], 0
    %20 = vsyncpa [#allocation10], 0
    %21 = vsyncpa [#allocation13], 0
    %22 = vsyncpa [#allocation16], 0
    %23 = vsyncpa [#allocation8], 0
    // Predicated region
    $region2: #{tpu_custom_call.1} parent=1 // pred_check
      _
    $region3: #{tpu_custom_call.1} parent=1 // pred_check_branch
      %25 = sbr.rel (0) target = $region5
    $region4: #{tpu_custom_call.1} parent=1 // pred_region
      %s27 = ssub.s32 384, 384
      %28 = vsyncadd [#allocation7], %s27
      %s30 = sshll.u32 [#allocation6], 4
      %s31 = int_to_ptr.vmem [resolvable:$true] %s30
      %33 = dma.hbm_to_vmem [thread:$0]  %s1, 384, %s31, [#allocation7]
    $region5: #{tpu_custom_call.1} parent=1 // pred_fallthru
      _
    // Predicated region
    $region6: #{tpu_custom_call.1} parent=1 // pred_check
      _
    $region7: #{tpu_custom_call.1} parent=1 // pred_check_branch
      %35 = sbr.rel (0) target = $region9
    $region8: #{tpu_custom_call.1} parent=1 // pred_region
      %s37 = ssub.s32 128, 128
      %38 = vsyncadd [#allocation10], %s37
      %s40 = sshll.u32 [#allocation9], 4
      %s41 = int_to_ptr.vmem [resolvable:$true] %s40
      %43 = dma.hbm_to_vmem [thread:$0]  %s2, 128, %s41, [#allocation10]
    $region9: #{tpu_custom_call.1} parent=1 // pred_fallthru
      _
    // Predicated region
    $region10: #{tpu_custom_call.1} parent=1 // pred_check
      _
    $region11: #{tpu_custom_call.1} parent=1 // pred_check_branch
      %45 = sbr.rel (0) target = $region13
    $region12: #{tpu_custom_call.1} parent=1 // pred_region
      %s47 = ssub.s32 384, 384
      %48 = vsyncadd [#allocation10], %s47
      %s50 = sshll.u32 [#allocation11], 4
      %s51 = int_to_ptr.vmem [resolvable:$true] %s50
      %53 = dma.hbm_to_vmem [thread:$0]  %s3, 384, %s51, [#allocation10]
    $region13: #{tpu_custom_call.1} parent=1 // pred_fallthru
      _
    // Predicated region
    $region14: #{tpu_custom_call.1} parent=1 // pred_check
      _
    $region15: #{tpu_custom_call.1} parent=1 // pred_check_branch
      %55 = sbr.rel (0) target = $region17
    $region16: #{tpu_custom_call.1} parent=1 // pred_region
      %s57 = ssub.s32 768, 768
      %58 = vsyncadd [#allocation13], %s57
      %s59 = sshll.u32 [#allocation12], 4
      %s60 = int_to_ptr.vmem [resolvable:$true] %s59
      %65 = dma.hbm_to_vmem [thread:$0]  %s4, 768, %s60, [#allocation13], 192, 192, 12
    $region17: #{tpu_custom_call.1} parent=1 // pred_fallthru
      _
    // Predicated region
    $region18: #{tpu_custom_call.1} parent=1 // pred_check
      _
    $region19: #{tpu_custom_call.1} parent=1 // pred_check_branch
      %67 = sbr.rel (0) target = $region21
    $region20: #{tpu_custom_call.1} parent=1 // pred_region
      %s69 = ssub.s32 6144, 6144
      %70 = vsyncadd [#allocation13], %s69
      %s71 = sshll.u32 [#allocation14], 4
      %s72 = int_to_ptr.vmem [resolvable:$true] %s71
      %77 = dma.hbm_to_vmem [thread:$0]  %s5, 6144, %s72, [#allocation13], 192, 192, 12
    $region21: #{tpu_custom_call.1} parent=1 // pred_fallthru
      _
    // Predicated region
    $region22: #{tpu_custom_call.1} parent=1 // pred_check
      _
    $region23: #{tpu_custom_call.1} parent=1 // pred_check_branch
      %79 = sbr.rel (0) target = $region25
    $region24: #{tpu_custom_call.1} parent=1 // pred_region
      %s81 = ssub.s32 3072, 3072
      %82 = vsyncadd [#allocation16], %s81
      %s83 = sshll.u32 [#allocation15], 4
      %s84 = int_to_ptr.vmem [resolvable:$true] %s83
      %89 = dma.hbm_to_vmem [thread:$0]  %s6, 3072, %s84, [#allocation16], 192, 192, 12
    $region25: #{tpu_custom_call.1} parent=1 // pred_fallthru
      _
    // Predicated region
    $region26: #{tpu_custom_call.1} parent=1 // pred_check
      _
    $region27: #{tpu_custom_call.1} parent=1 // pred_check_branch
      %91 = sbr.rel (0) target = $region29
    $region28: #{tpu_custom_call.1} parent=1 // pred_region
      _
    $region29: #{tpu_custom_call.1} parent=1 // pred_fallthru
      _
    // Predicated region
    $region30: #{tpu_custom_call.1} parent=1 // pred_check
      _
    $region31: #{tpu_custom_call.1} parent=1 // pred_check_branch
      %93 = sbr.rel (0) target = $region33
    $region32: #{tpu_custom_call.1} parent=1 // pred_region
      %s95 = ssub.s32 2048, 2048
      %96 = vsyncadd [#allocation16], %s95
      %s97 = sshll.u32 [#allocation17], 4
      %s98 = int_to_ptr.vmem [resolvable:$true] %s97
      %103 = dma.hbm_to_vmem [thread:$0]  %s8, 2048, %s98, [#allocation16], 128, 128, 8
    $region33: #{tpu_custom_call.1} parent=1 // pred_fallthru
      _
    // Predicated region
    $region34: #{tpu_custom_call.1} parent=1 // pred_check
      _
    $region35: #{tpu_custom_call.1} parent=1 // pred_check_branch
      %105 = sbr.rel (0) target = $region37
    $region36: #{tpu_custom_call.1} parent=1 // pred_region
      _
    $region37: #{tpu_custom_call.1} parent=1 // pred_fallthru
      _
    // Predicated region
    $region38: #{tpu_custom_call.1} parent=1 // pred_check
      _
    $region39: #{tpu_custom_call.1} parent=1 // pred_check_branch
      %107 = sbr.rel (0) target = $region41
    $region40: #{tpu_custom_call.1} parent=1 // pred_region
      %108 = dma.done [#allocation7], 384
    $region41: #{tpu_custom_call.1} parent=1 // pred_fallthru
      _
    // Predicated region
    $region42: #{tpu_custom_call.1} parent=1 // pred_check
      _
    $region43: #{tpu_custom_call.1} parent=1 // pred_check_branch
      %110 = sbr.rel (0) target = $region45
    $region44: #{tpu_custom_call.1} parent=1 // pred_region
      %111 = dma.done [#allocation10], 128
    $region45: #{tpu_custom_call.1} parent=1 // pred_fallthru
      _
    // Predicated region
    $region46: #{tpu_custom_call.1} parent=1 // pred_check
      _
    $region47: #{tpu_custom_call.1} parent=1 // pred_check_branch
      %113 = sbr.rel (0) target = $region49
    $region48: #{tpu_custom_call.1} parent=1 // pred_region
      %114 = dma.done [#allocation10], 384
    $region49: #{tpu_custom_call.1} parent=1 // pred_fallthru
      _
    // Predicated region
    $region50: #{tpu_custom_call.1} parent=1 // pred_check
      _
    $region51: #{tpu_custom_call.1} parent=1 // pred_check_branch
      %116 = sbr.rel (0) target = $region53
    $region52: #{tpu_custom_call.1} parent=1 // pred_region
      %117 = dma.done [#allocation13], 768
    $region53: #{tpu_custom_call.1} parent=1 // pred_fallthru
      _
    // Predicated region
    $region54: #{tpu_custom_call.1} parent=1 // pred_check
      _
    $region55: #{tpu_custom_call.1} parent=1 // pred_check_branch
      %119 = sbr.rel (0) target = $region57
    $region56: #{tpu_custom_call.1} parent=1 // pred_region
      %120 = dma.done [#allocation13], 6144
    $region57: #{tpu_custom_call.1} parent=1 // pred_fallthru
      _
    // Predicated region
    $region58: #{tpu_custom_call.1} parent=1 // pred_check
      _
    $region59: #{tpu_custom_call.1} parent=1 // pred_check_branch
      %122 = sbr.rel (0) target = $region61
    $region60: #{tpu_custom_call.1} parent=1 // pred_region
      %123 = dma.done [#allocation16], 3072
    $region61: #{tpu_custom_call.1} parent=1 // pred_fallthru
      _
    // Predicated region
    $region62: #{tpu_custom_call.1} parent=1 // pred_check
      _
    $region63: #{tpu_custom_call.1} parent=1 // pred_check_branch
      %125 = sbr.rel (0) target = $region65
    $region64: #{tpu_custom_call.1} parent=1 // pred_region
      %126 = dma.done [#allocation16], 2048
    $region65: #{tpu_custom_call.1} parent=1 // pred_fallthru
      _
    %v128 = vld [vmem:[#allocation9] sm:$0xff]
    %129 = vst [vmem:[#allocation2] sm:$0xff] %v128
    %v130 = vld [vmem:[#allocation11] sm:$0xff]
    %v131 = vld [vmem:[#allocation11 + $0x8] sm:$0xff]
    %v132 = vld [vmem:[#allocation11 + $0x10] sm:$0xff]
    %133 = vst [vmem:[#allocation3] sm:$0xff] %v130
    %134 = vst [vmem:[#allocation3 + $0x8] sm:$0xff] %v131
    %135 = vst [vmem:[#allocation3 + $0x10] sm:$0xff] %v132
    %v136 = vld [vmem:[#allocation6] sm:$0xff]
    %v137 = vld [vmem:[#allocation6 + $0x8] sm:$0xff]
    %v138 = vld [vmem:[#allocation6 + $0x10] sm:$0xff]
    %v139 = vld [vmem:[%s7] sm:$0x7]
    %v140 = vld [vmem:[%s9] sm:$0x3]
    %v141 = vlaneseq
    %v142 = vand.u32 %v141, 127
    %v143 = vadd.s32 %v142, 128
    %v144 = vcvt.s32.f32 %v142
    %v145 = vcvt.s32.f32 %v143
    loop: start=0, step=1, limit=4
    $region66: #{tpu_custom_call.1} parent=1 // loop_pre_header
      _
    $region67: #{tpu_custom_call.1} parent=1 // loop_header
      %s147 = sphi 0, %s151
      %p148 = scmp.ge.s32.totalorder %s147, 4
    $region68: #{tpu_custom_call.1} parent=1 // loop_header_branch
      %150 = sbr.rel (%p148) target = $region72
    $region69: #{tpu_custom_call.1} parent=1 // loop_body
      %v152 = vld [vmem:[#allocation2] sm:$0xff]
      %s153 = sld [smem:[#allocation5 + %s147]]
      %v154 = vstv %s153
      %vm155 = vcmp.eq.s32.totalorder %v154, 1
      %s156 = smul.u32 %s147, 3
      %s157 = smul.addr %s156, 4
      %s158 = scalar_lea.vmem [#allocation12], %s157
      %v159 = vld [vmem:[%s158] sm:$0xff]
      %v160 = vld [vmem:[%s158 + $0x8] sm:$0xf]
      %v161 = vunpack.c.l.bf16 %v159
      %v162 = vunpack.c.h.bf16 %v159
      %v163 = vunpack.c.l.bf16 %v160
      %v164 = vld [vmem:[#allocation3] sm:$0xff]
      %v165 = vld [vmem:[#allocation3 + $0x8] sm:$0xff]
      %v166 = vld [vmem:[#allocation3 + $0x10] sm:$0xff]
      %v167 = vsel %vm155, %v161, %v164
      %v168 = vsel %vm155, %v162, %v165
      %v169 = vsel %vm155, %v163, %v166
      %v170 = vadd.f32 %v167, %v136
      %v171 = vadd.f32 %v168, %v137
      %v172 = vadd.f32 %v169, %v138
      %v173 = vpack.c.bf16 %v152, %v152
      %v174 = vld [vmem:[#allocation15] sm:$0xff]
      %v175 = vld [vmem:[#allocation15 + $0x8] sm:$0xf]
      %v176 = vld [vmem:[#allocation15 + $0xc] sm:$0xff]
      %v177 = vld [vmem:[#allocation15 + $0x14] sm:$0xf]
      %v178 = vld [vmem:[#allocation15 + $0x18] sm:$0xff]
      %v179 = vld [vmem:[#allocation15 + $0x20] sm:$0xf]
      %v180 = vld [vmem:[#allocation15 + $0x24] sm:$0xff]
      %v181 = vld [vmem:[#allocation15 + $0x2c] sm:$0xf]
      %v182 = vld [vmem:[#allocation15 + $0x30] sm:$0xff]
      %v183 = vld [vmem:[#allocation15 + $0x38] sm:$0xf]
      %v184 = vld [vmem:[#allocation15 + $0x3c] sm:$0xff]
      %v185 = vld [vmem:[#allocation15 + $0x44] sm:$0xf]
      %v186 = vld [vmem:[#allocation15 + $0x48] sm:$0xff]
      %v187 = vld [vmem:[#allocation15 + $0x50] sm:$0xf]
      %v188 = vld [vmem:[#allocation15 + $0x54] sm:$0xff]
      %v189 = vld [vmem:[#allocation15 + $0x5c] sm:$0xf]
      %v190 = vld [vmem:[#allocation15 + $0x60] sm:$0xff]
      %v191 = vld [vmem:[#allocation15 + $0x68] sm:$0xf]
      %v192 = vld [vmem:[#allocation15 + $0x6c] sm:$0xff]
      %v193 = vld [vmem:[#allocation15 + $0x74] sm:$0xf]
      %v194 = vld [vmem:[#allocation15 + $0x78] sm:$0xff]
      %v195 = vld [vmem:[#allocation15 + $0x80] sm:$0xf]
      %v196 = vld [vmem:[#allocation15 + $0x84] sm:$0xff]
      %v197 = vld [vmem:[#allocation15 + $0x8c] sm:$0xf]
      %v198 = vld [vmem:[#allocation15 + $0x90] sm:$0xff]
      %v199 = vld [vmem:[#allocation15 + $0x98] sm:$0xf]
      %v200 = vld [vmem:[#allocation15 + $0x9c] sm:$0xff]
      %v201 = vld [vmem:[#allocation15 + $0xa4] sm:$0xf]
      %v202 = vld [vmem:[#allocation15 + $0xa8] sm:$0xff]
      %v203 = vld [vmem:[#allocation15 + $0xb0] sm:$0xf]
      %v204 = vld [vmem:[#allocation15 + $0xb4] sm:$0xff]
      %v205 = vld [vmem:[#allocation15 + $0xbc] sm:$0xf]
      %v207 = vlaneseq
      %v208 = vshrl.u32 %v207, 7
      %v209 = vsub.s32 0, %v208
      %v210 = vrot.slane %v139, %v209
      %v211 = vlaneseq
      %v212 = vshrl.u32 %v211, 7
      %v213 = vsub.s32 1, %v212
      %v214 = vrot.slane %v139, %v213
      %v215 = vlaneseq
      %v216 = vshrl.u32 %v215, 7
      %v217 = vsub.s32 2, %v216
      %v218 = vrot.slane %v139, %v217
      %v254 = vunpack.c.l.b16 %v174
      %v255 = vunpack.c.h.b16 %v174
      %v256 = vunpack.c.l.b16 %v175
      %v257 = vunpack.c.l.b16 %v176
      %v258 = vunpack.c.h.b16 %v176
      %v259 = vunpack.c.l.b16 %v177
      %v260 = vunpack.c.l.b16 %v178
      %v261 = vunpack.c.h.b16 %v178
      %v262 = vunpack.c.l.b16 %v179
      %v263 = vunpack.c.l.b16 %v180
      %v264 = vunpack.c.h.b16 %v180
      %v265 = vunpack.c.l.b16 %v181
      %v266 = vunpack.c.l.b16 %v182
      %v267 = vunpack.c.h.b16 %v182
      %v268 = vunpack.c.l.b16 %v183
      %v269 = vunpack.c.l.b16 %v184
      %v270 = vunpack.c.h.b16 %v184
      %v271 = vunpack.c.l.b16 %v185
      %v272 = vunpack.c.l.b16 %v186
      %v273 = vunpack.c.h.b16 %v186
      %v274 = vunpack.c.l.b16 %v187
      %v275 = vunpack.c.l.b16 %v188
      %v276 = vunpack.c.h.b16 %v188
      %v277 = vunpack.c.l.b16 %v189
      %v278 = vunpack.c.l.b16 %v190
      %v279 = vunpack.c.h.b16 %v190
      %v280 = vunpack.c.l.b16 %v191
      %v281 = vunpack.c.l.b16 %v192
      %v282 = vunpack.c.h.b16 %v192
      %v283 = vunpack.c.l.b16 %v193
      %v284 = vunpack.c.l.b16 %v194
      %v285 = vunpack.c.h.b16 %v194
      %v286 = vunpack.c.l.b16 %v195
      %v287 = vunpack.c.l.b16 %v196
      %v288 = vunpack.c.h.b16 %v196
      %v289 = vunpack.c.l.b16 %v197
      %v290 = vunpack.c.l.b16 %v198
      %v291 = vunpack.c.h.b16 %v198
      %v292 = vunpack.c.l.b16 %v199
      %v293 = vunpack.c.l.b16 %v200
      %v294 = vunpack.c.h.b16 %v200
      %v295 = vunpack.c.l.b16 %v201
      %v296 = vunpack.c.l.b16 %v202
      %v297 = vunpack.c.h.b16 %v202
      %v298 = vunpack.c.l.b16 %v203
      %v299 = vunpack.c.l.b16 %v204
      %v300 = vunpack.c.h.b16 %v204
      %v301 = vunpack.c.l.b16 %v205
      %v302 = vpack.c.b16 %v257, %v254
      %v303 = vpack.c.b16 %v258, %v255
      %v304 = vpack.c.b16 %v259, %v256
      %v305 = vpack.c.b16 %v263, %v260
      %v306 = vpack.c.b16 %v264, %v261
      %v307 = vpack.c.b16 %v265, %v262
      %v308 = vpack.c.b16 %v269, %v266
      %v309 = vpack.c.b16 %v270, %v267
      %v310 = vpack.c.b16 %v271, %v268
      %v311 = vpack.c.b16 %v275, %v272
      %v312 = vpack.c.b16 %v276, %v273
      %v313 = vpack.c.b16 %v277, %v274
      %v314 = vpack.c.b16 %v281, %v278
      %v315 = vpack.c.b16 %v282, %v279
      %v316 = vpack.c.b16 %v283, %v280
      %v317 = vpack.c.b16 %v287, %v284
      %v318 = vpack.c.b16 %v288, %v285
      %v319 = vpack.c.b16 %v289, %v286
      %v320 = vpack.c.b16 %v293, %v290
      %v321 = vpack.c.b16 %v294, %v291
      %v322 = vpack.c.b16 %v295, %v292
      %v323 = vpack.c.b16 %v299, %v296
      %v324 = vpack.c.b16 %v300, %v297
      %v325 = vpack.c.b16 %v301, %v298
      %350 = vmatprep.subr.bf16.mxu0 %v303
      %351 = vmatpush1.bf16.msra.mxu0 %v302
      %352 = vmatprep.subr.bf16.mxu0 %v306
      %353 = vmatpush1.bf16.msra.mxu0 %v305
      %354 = vmatprep.subr.bf16.mxu0 %v309
      %355 = vmatpush1.bf16.msra.mxu0 %v308
      %356 = vmatprep.subr.bf16.mxu0 %v312
      %357 = vmatpush1.bf16.msra.mxu0 %v311
      %358 = vmatprep.subr.bf16.mxu0 %v315
      %359 = vmatpush1.bf16.msra.mxu0 %v314
      %360 = vmatprep.subr.bf16.mxu0 %v318
      %361 = vmatpush1.bf16.msra.mxu0 %v317
      %362 = vmatprep.subr.bf16.mxu0 %v321
      %363 = vmatpush1.bf16.msra.mxu0 %v320
      %364 = vmatprep.subr.bf16.mxu0 %v324
      %365 = vmatpush1.bf16.msra.mxu0 %v323
      %366 = vmatprep.subr.bf16.mxu0 0
      %367 = vmatpush1.bf16.msra.mxu0 0
      %368 = vmatprep.subr.bf16.mxu0 0
      %369 = vmatpush1.bf16.msra.mxu0 0
      %370 = vmatprep.subr.bf16.mxu0 0
      %371 = vmatpush1.bf16.msra.mxu0 0
      %372 = vmatprep.subr.bf16.mxu0 0
      %373 = vmatpush1.bf16.msra.mxu0 0
      %374 = vmatprep.subr.bf16.mxu0 0
      %375 = vmatpush1.bf16.msra.mxu0 0
      %376 = vmatprep.subr.bf16.mxu0 0
      %377 = vmatpush1.bf16.msra.mxu0 0
      %378 = vmatprep.subr.bf16.mxu0 0
      %379 = vmatpush1.bf16.msra.mxu0 0
      %380 = vmatprep.subr.bf16.mxu0 0
      %381 = vmatpush1.bf16.msra.mxu0 0
      %382 = vmatprep.mubr.bf16.mxu0 0
      %383 = vmatmul.mubr.bf16.gmra.mrb[0].mxu0 %v173
      %v384 = vpop.f32.mrb[0].mxu0
      %v385 = vadd.f32 %v210, %v384
      %v386 = vpop.f32.mrb[0].mxu0
      %v387 = vadd.f32 %v214, %v386
      %v388 = vpop.f32.mrb[0].mxu0
      %v389 = vpop.f32.mrb[0].mxu0
      %390 = vdwg.mxu0
      %391 = vmatprep.subr.bf16.mxu0 0
      %392 = vmatpush1.bf16.msra.mxu0 %v304
      %393 = vmatprep.subr.bf16.mxu0 0
      %394 = vmatpush1.bf16.msra.mxu0 %v307
      %395 = vmatprep.subr.bf16.mxu0 0
      %396 = vmatpush1.bf16.msra.mxu0 %v310
      %397 = vmatprep.subr.bf16.mxu0 0
      %398 = vmatpush1.bf16.msra.mxu0 %v313
      %399 = vmatprep.subr.bf16.mxu0 0
      %400 = vmatpush1.bf16.msra.mxu0 %v316
      %401 = vmatprep.subr.bf16.mxu0 0
      %402 = vmatpush1.bf16.msra.mxu0 %v319
      %403 = vmatprep.subr.bf16.mxu0 0
      %404 = vmatpush1.bf16.msra.mxu0 %v322
      %405 = vmatprep.subr.bf16.mxu0 0
      %406 = vmatpush1.bf16.msra.mxu0 %v325
      %407 = vmatprep.subr.bf16.mxu0 0
      %408 = vmatpush1.bf16.msra.mxu0 0
      %409 = vmatprep.subr.bf16.mxu0 0
      %410 = vmatpush1.bf16.msra.mxu0 0
      %411 = vmatprep.subr.bf16.mxu0 0
      %412 = vmatpush1.bf16.msra.mxu0 0
      %413 = vmatprep.subr.bf16.mxu0 0
      %414 = vmatpush1.bf16.msra.mxu0 0
      %415 = vmatprep.subr.bf16.mxu0 0
      %416 = vmatpush1.bf16.msra.mxu0 0
      %417 = vmatprep.subr.bf16.mxu0 0
      %418 = vmatpush1.bf16.msra.mxu0 0
      %419 = vmatprep.subr.bf16.mxu0 0
      %420 = vmatpush1.bf16.msra.mxu0 0
      %421 = vmatprep.subr.bf16.mxu0 0
      %422 = vmatpush1.bf16.msra.mxu0 0
      %423 = vmatprep.mubr.bf16.mxu0 0
      %424 = vmatmul.mubr.bf16.gmra.mrb[0].mxu0 %v173
      %v425 = vpop.f32.mrb[0].mxu0
      %v426 = vadd.f32 %v218, %v425
      %v427 = vpop.f32.mrb[0].mxu0
      %v428 = vpop.f32.mrb[0].mxu0
      %v429 = vpop.f32.mrb[0].mxu0
      %430 = vdwg.mxu0
      %v431 = vadd.f32 %v170, %v385
      %v432 = vxor.u32 %v431, 2147483648
      %v433 = vmul.f32 %v432, 1.442695
      %v434 = vpow.pop %v433
      %v435 = vadd.f32 %v434, 1.0
      %v436 = vrcp.pop %v435
      %v437 = vmul.f32 1.0, %v436
      %v438 = vadd.f32 %v171, %v387
      %v439 = vxor.u32 %v438, 2147483648
      %v440 = vmul.f32 %v439, 1.442695
      %v441 = vpow.pop %v440
      %v442 = vadd.f32 %v441, 1.0
      %v443 = vrcp.pop %v442
      %v444 = vmul.f32 1.0, %v443
      %v445 = vmul.f32 %v437, %v426
      %v446 = vadd.f32 %v172, %v445
      %v447 = vtanh.pop %v446
      %v448 = vsub.f32 1.0, %v444
      %v449 = vmul.f32 %v448, %v447
      %v450 = vmul.f32 %v444, %v152
      %v451 = vadd.f32 %v449, %v450
      %v452 = vpack.c.bf16 %v451, %v451
      %v453 = vld [vmem:[#allocation17] sm:$0xff]
      %v454 = vld [vmem:[#allocation17 + $0x8] sm:$0xff]
      %v455 = vld [vmem:[#allocation17 + $0x10] sm:$0xff]
      %v456 = vld [vmem:[#allocation17 + $0x18] sm:$0xff]
      %v457 = vld [vmem:[#allocation17 + $0x20] sm:$0xff]
      %v458 = vld [vmem:[#allocation17 + $0x28] sm:$0xff]
      %v459 = vld [vmem:[#allocation17 + $0x30] sm:$0xff]
      %v460 = vld [vmem:[#allocation17 + $0x38] sm:$0xff]
      %v461 = vld [vmem:[#allocation17 + $0x40] sm:$0xff]
      %v462 = vld [vmem:[#allocation17 + $0x48] sm:$0xff]
      %v463 = vld [vmem:[#allocation17 + $0x50] sm:$0xff]
      %v464 = vld [vmem:[#allocation17 + $0x58] sm:$0xff]
      %v465 = vld [vmem:[#allocation17 + $0x60] sm:$0xff]
      %v466 = vld [vmem:[#allocation17 + $0x68] sm:$0xff]
      %v467 = vld [vmem:[#allocation17 + $0x70] sm:$0xff]
      %v468 = vld [vmem:[#allocation17 + $0x78] sm:$0xff]
      %v470 = vlaneseq
      %v471 = vshrl.u32 %v470, 7
      %v472 = vsub.s32 0, %v471
      %v473 = vrot.slane %v140, %v472
      %v474 = vlaneseq
      %v475 = vshrl.u32 %v474, 7
      %v476 = vsub.s32 1, %v475
      %v477 = vrot.slane %v140, %v476
      %v496 = vunpack.c.l.b16 %v453
      %v497 = vunpack.c.h.b16 %v453
      %v498 = vunpack.c.l.b16 %v454
      %v499 = vunpack.c.h.b16 %v454
      %v500 = vunpack.c.l.b16 %v455
      %v501 = vunpack.c.h.b16 %v455
      %v502 = vunpack.c.l.b16 %v456
      %v503 = vunpack.c.h.b16 %v456
      %v504 = vunpack.c.l.b16 %v457
      %v505 = vunpack.c.h.b16 %v457
      %v506 = vunpack.c.l.b16 %v458
      %v507 = vunpack.c.h.b16 %v458
      %v508 = vunpack.c.l.b16 %v459
      %v509 = vunpack.c.h.b16 %v459
      %v510 = vunpack.c.l.b16 %v460
      %v511 = vunpack.c.h.b16 %v460
      %v512 = vunpack.c.l.b16 %v461
      %v513 = vunpack.c.h.b16 %v461
      %v514 = vunpack.c.l.b16 %v462
      %v515 = vunpack.c.h.b16 %v462
      %v516 = vunpack.c.l.b16 %v463
      %v517 = vunpack.c.h.b16 %v463
      %v518 = vunpack.c.l.b16 %v464
      %v519 = vunpack.c.h.b16 %v464
      %v520 = vunpack.c.l.b16 %v465
      %v521 = vunpack.c.h.b16 %v465
      %v522 = vunpack.c.l.b16 %v466
      %v523 = vunpack.c.h.b16 %v466
      %v524 = vunpack.c.l.b16 %v467
      %v525 = vunpack.c.h.b16 %v467
      %v526 = vunpack.c.l.b16 %v468
      %v527 = vunpack.c.h.b16 %v468
      %v528 = vpack.c.b16 %v498, %v496
      %v529 = vpack.c.b16 %v499, %v497
      %v530 = vpack.c.b16 %v502, %v500
      %v531 = vpack.c.b16 %v503, %v501
      %v532 = vpack.c.b16 %v506, %v504
      %v533 = vpack.c.b16 %v507, %v505
      %v534 = vpack.c.b16 %v510, %v508
      %v535 = vpack.c.b16 %v511, %v509
      %v536 = vpack.c.b16 %v514, %v512
      %v537 = vpack.c.b16 %v515, %v513
      %v538 = vpack.c.b16 %v518, %v516
      %v539 = vpack.c.b16 %v519, %v517
      %v540 = vpack.c.b16 %v522, %v520
      %v541 = vpack.c.b16 %v523, %v521
      %v542 = vpack.c.b16 %v526, %v524
      %v543 = vpack.c.b16 %v527, %v525
      %560 = vmatprep.subr.bf16.mxu0 %v529
      %561 = vmatpush1.bf16.msra.mxu0 %v528
      %562 = vmatprep.subr.bf16.mxu0 %v531
      %563 = vmatpush1.bf16.msra.mxu0 %v530
      %564 = vmatprep.subr.bf16.mxu0 %v533
      %565 = vmatpush1.bf16.msra.mxu0 %v532
      %566 = vmatprep.subr.bf16.mxu0 %v535
      %567 = vmatpush1.bf16.msra.mxu0 %v534
      %568 = vmatprep.subr.bf16.mxu0 %v537
      %569 = vmatpush1.bf16.msra.mxu0 %v536
      %570 = vmatprep.subr.bf16.mxu0 %v539
      %571 = vmatpush1.bf16.msra.mxu0 %v538
      %572 = vmatprep.subr.bf16.mxu0 %v541
      %573 = vmatpush1.bf16.msra.mxu0 %v540
      %574 = vmatprep.subr.bf16.mxu0 %v543
      %575 = vmatpush1.bf16.msra.mxu0 %v542
      %576 = vmatprep.subr.bf16.mxu0 0
      %577 = vmatpush1.bf16.msra.mxu0 0
      %578 = vmatprep.subr.bf16.mxu0 0
      %579 = vmatpush1.bf16.msra.mxu0 0
      %580 = vmatprep.subr.bf16.mxu0 0
      %581 = vmatpush1.bf16.msra.mxu0 0
      %582 = vmatprep.subr.bf16.mxu0 0
      %583 = vmatpush1.bf16.msra.mxu0 0
      %584 = vmatprep.subr.bf16.mxu0 0
      %585 = vmatpush1.bf16.msra.mxu0 0
      %586 = vmatprep.subr.bf16.mxu0 0
      %587 = vmatpush1.bf16.msra.mxu0 0
      %588 = vmatprep.subr.bf16.mxu0 0
      %589 = vmatpush1.bf16.msra.mxu0 0
      %590 = vmatprep.subr.bf16.mxu0 0
      %591 = vmatpush1.bf16.msra.mxu0 0
      %592 = vmatprep.mubr.bf16.mxu0 0
      %593 = vmatmul.mubr.bf16.gmra.mrb[0].mxu0 %v452
      %v594 = vpop.f32.mrb[0].mxu0
      %v595 = vadd.f32 %v473, %v594
      %v596 = vpop.f32.mrb[0].mxu0
      %v597 = vadd.f32 %v477, %v596
      %v598 = vpop.f32.mrb[0].mxu0
      %v599 = vpop.f32.mrb[0].mxu0
      %600 = vdwg.mxu0
      %s601 = smul.u32 %s147, 2
      %s602 = smul.addr %s601, 8
      %s603 = scalar_lea.vmem [#allocation18], %s602
      %604 = vst [vmem:[%s603] sm:$0xff] %v595
      %605 = vst [vmem:[%s603 + $0x8] sm:$0xff] %v597
      %606 = vst [vmem:[#allocation2] sm:$0xff] %v451
      %s607 = sadd.s32 %s147, 1
      %s608 = sld [smem:[#allocation5 + %s607]]
      %p609 = scmp.eq.s32.totalorder %s608, 0
      // Predicated region
      $region73: #{tpu_custom_call.1} parent=69 // pred_check
        %p610 = pneg %p609
      $region74: #{tpu_custom_call.1} parent=69 // pred_check_branch
        %612 = sbr.rel (%p610) target = $region76
      $region75: #{tpu_custom_call.1} parent=69 // pred_region
        %v613 = vmax.f32 %v595, %v597
        %614 = vmax.xlane.f32.xlu0 %v613
        %v615 = vpop.xlane.xlu0 %614
        %vm616 = vcmp.eq.f32.partialorder %v595, %v615
        %vm617 = vcmp.eq.f32.partialorder %v597, %v615
        %v618 = vsub.f32 0.0, %v144
        %v619 = vsub.f32 0.0, %v145
        %v620 = vsel %vm616, %v618, -256.0
        %v621 = vsel %vm617, %v619, -256.0
        %v622 = vmax.f32 %v620, %v621
        %623 = vmax.xlane.f32.xlu0 %v622
        %v624 = vpop.xlane.xlu0 %623
        %v625 = vsub.f32 0.0, %v624
        %vm626 = vcmp.eq.f32.partialorder %v144, %v625
        %vm627 = vcmp.eq.f32.partialorder %v145, %v625
        %v628 = vsel %vm626, 1.0, 0.0
        %v629 = vsel %vm627, 1.0, 0.0
        %v630 = vpack.c.bf16 %v628, %v628
        %v631 = vpack.c.bf16 %v629, %v629
        %v632 = vld [vmem:[#allocation14] sm:$0xff]
        %v633 = vld [vmem:[#allocation14 + $0x8] sm:$0xf]
        %v634 = vld [vmem:[#allocation14 + $0xc] sm:$0xff]
        %v635 = vld [vmem:[#allocation14 + $0x14] sm:$0xf]
        %v636 = vld [vmem:[#allocation14 + $0x18] sm:$0xff]
        %v637 = vld [vmem:[#allocation14 + $0x20] sm:$0xf]
        %v638 = vld [vmem:[#allocation14 + $0x24] sm:$0xff]
        %v639 = vld [vmem:[#allocation14 + $0x2c] sm:$0xf]
        %v640 = vld [vmem:[#allocation14 + $0x30] sm:$0xff]
        %v641 = vld [vmem:[#allocation14 + $0x38] sm:$0xf]
        %v642 = vld [vmem:[#allocation14 + $0x3c] sm:$0xff]
        %v643 = vld [vmem:[#allocation14 + $0x44] sm:$0xf]
        %v644 = vld [vmem:[#allocation14 + $0x48] sm:$0xff]
        %v645 = vld [vmem:[#allocation14 + $0x50] sm:$0xf]
        %v646 = vld [vmem:[#allocation14 + $0x54] sm:$0xff]
        %v647 = vld [vmem:[#allocation14 + $0x5c] sm:$0xf]
        %v648 = vld [vmem:[#allocation14 + $0x60] sm:$0xff]
        %v649 = vld [vmem:[#allocation14 + $0x68] sm:$0xf]
        %v650 = vld [vmem:[#allocation14 + $0x6c] sm:$0xff]
        %v651 = vld [vmem:[#allocation14 + $0x74] sm:$0xf]
        %v652 = vld [vmem:[#allocation14 + $0x78] sm:$0xff]
        %v653 = vld [vmem:[#allocation14 + $0x80] sm:$0xf]
        %v654 = vld [vmem:[#allocation14 + $0x84] sm:$0xff]
        %v655 = vld [vmem:[#allocation14 + $0x8c] sm:$0xf]
        %v656 = vld [vmem:[#allocation14 + $0x90] sm:$0xff]
        %v657 = vld [vmem:[#allocation14 + $0x98] sm:$0xf]
        %v658 = vld [vmem:[#allocation14 + $0x9c] sm:$0xff]
        %v659 = vld [vmem:[#allocation14 + $0xa4] sm:$0xf]
        %v660 = vld [vmem:[#allocation14 + $0xa8] sm:$0xff]
        %v661 = vld [vmem:[#allocation14 + $0xb0] sm:$0xf]
        %v662 = vld [vmem:[#allocation14 + $0xb4] sm:$0xff]
        %v663 = vld [vmem:[#allocation14 + $0xbc] sm:$0xf]
        %v664 = vld [vmem:[#allocation14 + $0xc0] sm:$0xff]
        %v665 = vld [vmem:[#allocation14 + $0xc8] sm:$0xf]
        %v666 = vld [vmem:[#allocation14 + $0xcc] sm:$0xff]
        %v667 = vld [vmem:[#allocation14 + $0xd4] sm:$0xf]
        %v668 = vld [vmem:[#allocation14 + $0xd8] sm:$0xff]
        %v669 = vld [vmem:[#allocation14 + $0xe0] sm:$0xf]
        %v670 = vld [vmem:[#allocation14 + $0xe4] sm:$0xff]
        %v671 = vld [vmem:[#allocation14 + $0xec] sm:$0xf]
        %v672 = vld [vmem:[#allocation14 + $0xf0] sm:$0xff]
        %v673 = vld [vmem:[#allocation14 + $0xf8] sm:$0xf]
        %v674 = vld [vmem:[#allocation14 + $0xfc] sm:$0xff]
        %v675 = vld [vmem:[#allocation14 + $0x104] sm:$0xf]
        %v676 = vld [vmem:[#allocation14 + $0x108] sm:$0xff]
        %v677 = vld [vmem:[#allocation14 + $0x110] sm:$0xf]
        %v678 = vld [vmem:[#allocation14 + $0x114] sm:$0xff]
        %v679 = vld [vmem:[#allocation14 + $0x11c] sm:$0xf]
        %v680 = vld [vmem:[#allocation14 + $0x120] sm:$0xff]
        %v681 = vld [vmem:[#allocation14 + $0x128] sm:$0xf]
        %v682 = vld [vmem:[#allocation14 + $0x12c] sm:$0xff]
        %v683 = vld [vmem:[#allocation14 + $0x134] sm:$0xf]
        %v684 = vld [vmem:[#allocation14 + $0x138] sm:$0xff]
        %v685 = vld [vmem:[#allocation14 + $0x140] sm:$0xf]
        %v686 = vld [vmem:[#allocation14 + $0x144] sm:$0xff]
        %v687 = vld [vmem:[#allocation14 + $0x14c] sm:$0xf]
        %v688 = vld [vmem:[#allocation14 + $0x150] sm:$0xff]
        %v689 = vld [vmem:[#allocation14 + $0x158] sm:$0xf]
        %v690 = vld [vmem:[#allocation14 + $0x15c] sm:$0xff]
        %v691 = vld [vmem:[#allocation14 + $0x164] sm:$0xf]
        %v692 = vld [vmem:[#allocation14 + $0x168] sm:$0xff]
        %v693 = vld [vmem:[#allocation14 + $0x170] sm:$0xf]
        %v694 = vld [vmem:[#allocation14 + $0x174] sm:$0xff]
        %v695 = vld [vmem:[#allocation14 + $0x17c] sm:$0xf]
        %v760 = vunpack.c.l.b16 %v632
        %v761 = vunpack.c.h.b16 %v632
        %v762 = vunpack.c.l.b16 %v633
        %v763 = vunpack.c.l.b16 %v634
        %v764 = vunpack.c.h.b16 %v634
        %v765 = vunpack.c.l.b16 %v635
        %v766 = vunpack.c.l.b16 %v636
        %v767 = vunpack.c.h.b16 %v636
        %v768 = vunpack.c.l.b16 %v637
        %v769 = vunpack.c.l.b16 %v638
        %v770 = vunpack.c.h.b16 %v638
        %v771 = vunpack.c.l.b16 %v639
        %v772 = vunpack.c.l.b16 %v640
        %v773 = vunpack.c.h.b16 %v640
        %v774 = vunpack.c.l.b16 %v641
        %v775 = vunpack.c.l.b16 %v642
        %v776 = vunpack.c.h.b16 %v642
        %v777 = vunpack.c.l.b16 %v643
        %v778 = vunpack.c.l.b16 %v644
        %v779 = vunpack.c.h.b16 %v644
        %v780 = vunpack.c.l.b16 %v645
        %v781 = vunpack.c.l.b16 %v646
        %v782 = vunpack.c.h.b16 %v646
        %v783 = vunpack.c.l.b16 %v647
        %v784 = vunpack.c.l.b16 %v648
        %v785 = vunpack.c.h.b16 %v648
        %v786 = vunpack.c.l.b16 %v649
        %v787 = vunpack.c.l.b16 %v650
        %v788 = vunpack.c.h.b16 %v650
        %v789 = vunpack.c.l.b16 %v651
        %v790 = vunpack.c.l.b16 %v652
        %v791 = vunpack.c.h.b16 %v652
        %v792 = vunpack.c.l.b16 %v653
        %v793 = vunpack.c.l.b16 %v654
        %v794 = vunpack.c.h.b16 %v654
        %v795 = vunpack.c.l.b16 %v655
        %v796 = vunpack.c.l.b16 %v656
        %v797 = vunpack.c.h.b16 %v656
        %v798 = vunpack.c.l.b16 %v657
        %v799 = vunpack.c.l.b16 %v658
        %v800 = vunpack.c.h.b16 %v658
        %v801 = vunpack.c.l.b16 %v659
        %v802 = vunpack.c.l.b16 %v660
        %v803 = vunpack.c.h.b16 %v660
        %v804 = vunpack.c.l.b16 %v661
        %v805 = vunpack.c.l.b16 %v662
        %v806 = vunpack.c.h.b16 %v662
        %v807 = vunpack.c.l.b16 %v663
        %v808 = vunpack.c.l.b16 %v664
        %v809 = vunpack.c.h.b16 %v664
        %v810 = vunpack.c.l.b16 %v665
        %v811 = vunpack.c.l.b16 %v666
        %v812 = vunpack.c.h.b16 %v666
        %v813 = vunpack.c.l.b16 %v667
        %v814 = vunpack.c.l.b16 %v668
        %v815 = vunpack.c.h.b16 %v668
        %v816 = vunpack.c.l.b16 %v669
        %v817 = vunpack.c.l.b16 %v670
        %v818 = vunpack.c.h.b16 %v670
        %v819 = vunpack.c.l.b16 %v671
        %v820 = vunpack.c.l.b16 %v672
        %v821 = vunpack.c.h.b16 %v672
        %v822 = vunpack.c.l.b16 %v673
        %v823 = vunpack.c.l.b16 %v674
        %v824 = vunpack.c.h.b16 %v674
        %v825 = vunpack.c.l.b16 %v675
        %v826 = vunpack.c.l.b16 %v676
        %v827 = vunpack.c.h.b16 %v676
        %v828 = vunpack.c.l.b16 %v677
        %v829 = vunpack.c.l.b16 %v678
        %v830 = vunpack.c.h.b16 %v678
        %v831 = vunpack.c.l.b16 %v679
        %v832 = vunpack.c.l.b16 %v680
        %v833 = vunpack.c.h.b16 %v680
        %v834 = vunpack.c.l.b16 %v681
        %v835 = vunpack.c.l.b16 %v682
        %v836 = vunpack.c.h.b16 %v682
        %v837 = vunpack.c.l.b16 %v683
        %v838 = vunpack.c.l.b16 %v684
        %v839 = vunpack.c.h.b16 %v684
        %v840 = vunpack.c.l.b16 %v685
        %v841 = vunpack.c.l.b16 %v686
        %v842 = vunpack.c.h.b16 %v686
        %v843 = vunpack.c.l.b16 %v687
        %v844 = vunpack.c.l.b16 %v688
        %v845 = vunpack.c.h.b16 %v688
        %v846 = vunpack.c.l.b16 %v689
        %v847 = vunpack.c.l.b16 %v690
        %v848 = vunpack.c.h.b16 %v690
        %v849 = vunpack.c.l.b16 %v691
        %v850 = vunpack.c.l.b16 %v692
        %v851 = vunpack.c.h.b16 %v692
        %v852 = vunpack.c.l.b16 %v693
        %v853 = vunpack.c.l.b16 %v694
        %v854 = vunpack.c.h.b16 %v694
        %v855 = vunpack.c.l.b16 %v695
        %v856 = vpack.c.b16 %v763, %v760
        %v857 = vpack.c.b16 %v764, %v761
        %v858 = vpack.c.b16 %v765, %v762
        %v859 = vpack.c.b16 %v769, %v766
        %v860 = vpack.c.b16 %v770, %v767
        %v861 = vpack.c.b16 %v771, %v768
        %v862 = vpack.c.b16 %v775, %v772
        %v863 = vpack.c.b16 %v776, %v773
        %v864 = vpack.c.b16 %v777, %v774
        %v865 = vpack.c.b16 %v781, %v778
        %v866 = vpack.c.b16 %v782, %v779
        %v867 = vpack.c.b16 %v783, %v780
        %v868 = vpack.c.b16 %v787, %v784
        %v869 = vpack.c.b16 %v788, %v785
        %v870 = vpack.c.b16 %v789, %v786
        %v871 = vpack.c.b16 %v793, %v790
        %v872 = vpack.c.b16 %v794, %v791
        %v873 = vpack.c.b16 %v795, %v792
        %v874 = vpack.c.b16 %v799, %v796
        %v875 = vpack.c.b16 %v800, %v797
        %v876 = vpack.c.b16 %v801, %v798
        %v877 = vpack.c.b16 %v805, %v802
        %v878 = vpack.c.b16 %v806, %v803
        %v879 = vpack.c.b16 %v807, %v804
        %v880 = vpack.c.b16 %v811, %v808
        %v881 = vpack.c.b16 %v812, %v809
        %v882 = vpack.c.b16 %v813, %v810
        %v883 = vpack.c.b16 %v817, %v814
        %v884 = vpack.c.b16 %v818, %v815
        %v885 = vpack.c.b16 %v819, %v816
        %v886 = vpack.c.b16 %v823, %v820
        %v887 = vpack.c.b16 %v824, %v821
        %v888 = vpack.c.b16 %v825, %v822
        %v889 = vpack.c.b16 %v829, %v826
        %v890 = vpack.c.b16 %v830, %v827
        %v891 = vpack.c.b16 %v831, %v828
        %v892 = vpack.c.b16 %v835, %v832
        %v893 = vpack.c.b16 %v836, %v833
        %v894 = vpack.c.b16 %v837, %v834
        %v895 = vpack.c.b16 %v841, %v838
        %v896 = vpack.c.b16 %v842, %v839
        %v897 = vpack.c.b16 %v843, %v840
        %v898 = vpack.c.b16 %v847, %v844
        %v899 = vpack.c.b16 %v848, %v845
        %v900 = vpack.c.b16 %v849, %v846
        %v901 = vpack.c.b16 %v853, %v850
        %v902 = vpack.c.b16 %v854, %v851
        %v903 = vpack.c.b16 %v855, %v852
        %952 = vmatprep.subr.bf16.mxu0 %v857
        %953 = vmatpush1.bf16.msra.mxu0 %v856
        %954 = vmatprep.subr.bf16.mxu0 %v860
        %955 = vmatpush1.bf16.msra.mxu0 %v859
        %956 = vmatprep.subr.bf16.mxu0 %v863
        %957 = vmatpush1.bf16.msra.mxu0 %v862
        %958 = vmatprep.subr.bf16.mxu0 %v866
        %959 = vmatpush1.bf16.msra.mxu0 %v865
        %960 = vmatprep.subr.bf16.mxu0 %v869
        %961 = vmatpush1.bf16.msra.mxu0 %v868
        %962 = vmatprep.subr.bf16.mxu0 %v872
        %963 = vmatpush1.bf16.msra.mxu0 %v871
        %964 = vmatprep.subr.bf16.mxu0 %v875
        %965 = vmatpush1.bf16.msra.mxu0 %v874
        %966 = vmatprep.subr.bf16.mxu0 %v878
        %967 = vmatpush1.bf16.msra.mxu0 %v877
        %968 = vmatprep.subr.bf16.mxu0 %v881
        %969 = vmatpush1.bf16.msra.mxu0 %v880
        %970 = vmatprep.subr.bf16.mxu0 %v884
        %971 = vmatpush1.bf16.msra.mxu0 %v883
        %972 = vmatprep.subr.bf16.mxu0 %v887
        %973 = vmatpush1.bf16.msra.mxu0 %v886
        %974 = vmatprep.subr.bf16.mxu0 %v890
        %975 = vmatpush1.bf16.msra.mxu0 %v889
        %976 = vmatprep.subr.bf16.mxu0 %v893
        %977 = vmatpush1.bf16.msra.mxu0 %v892
        %978 = vmatprep.subr.bf16.mxu0 %v896
        %979 = vmatpush1.bf16.msra.mxu0 %v895
        %980 = vmatprep.subr.bf16.mxu0 %v899
        %981 = vmatpush1.bf16.msra.mxu0 %v898
        %982 = vmatprep.subr.bf16.mxu0 %v902
        %983 = vmatpush1.bf16.msra.mxu0 %v901
        %984 = vmatprep.mubr.bf16.mxu0 %v631
        %985 = vmatmul.mubr.bf16.gmra.mrb[0].mxu0 %v630
        %v986 = vpop.f32.mrb[0].mxu0
        %v987 = vadd.f32 0.0, %v986
        %v988 = vpop.f32.mrb[0].mxu0
        %v989 = vadd.f32 0.0, %v988
        %v990 = vpop.f32.mrb[0].mxu0
        %v991 = vpop.f32.mrb[0].mxu0
        %992 = vdwg.mxu0
        %993 = vmatprep.subr.bf16.mxu0 0
        %994 = vmatpush1.bf16.msra.mxu0 %v858
        %995 = vmatprep.subr.bf16.mxu0 0
        %996 = vmatpush1.bf16.msra.mxu0 %v861
        %997 = vmatprep.subr.bf16.mxu0 0
        %998 = vmatpush1.bf16.msra.mxu0 %v864
        %999 = vmatprep.subr.bf16.mxu0 0
        %1000 = vmatpush1.bf16.msra.mxu0 %v867
        %1001 = vmatprep.subr.bf16.mxu0 0
        %1002 = vmatpush1.bf16.msra.mxu0 %v870
        %1003 = vmatprep.subr.bf16.mxu0 0
        %1004 = vmatpush1.bf16.msra.mxu0 %v873
        %1005 = vmatprep.subr.bf16.mxu0 0
        %1006 = vmatpush1.bf16.msra.mxu0 %v876
        %1007 = vmatprep.subr.bf16.mxu0 0
        %1008 = vmatpush1.bf16.msra.mxu0 %v879
        %1009 = vmatprep.subr.bf16.mxu0 0
        %1010 = vmatpush1.bf16.msra.mxu0 %v882
        %1011 = vmatprep.subr.bf16.mxu0 0
        %1012 = vmatpush1.bf16.msra.mxu0 %v885
        %1013 = vmatprep.subr.bf16.mxu0 0
        %1014 = vmatpush1.bf16.msra.mxu0 %v888
        %1015 = vmatprep.subr.bf16.mxu0 0
        %1016 = vmatpush1.bf16.msra.mxu0 %v891
        %1017 = vmatprep.subr.bf16.mxu0 0
        %1018 = vmatpush1.bf16.msra.mxu0 %v894
        %1019 = vmatprep.subr.bf16.mxu0 0
        %1020 = vmatpush1.bf16.msra.mxu0 %v897
        %1021 = vmatprep.subr.bf16.mxu0 0
        %1022 = vmatpush1.bf16.msra.mxu0 %v900
        %1023 = vmatprep.subr.bf16.mxu0 0
        %1024 = vmatpush1.bf16.msra.mxu0 %v903
        %1025 = vmatprep.mubr.bf16.mxu0 %v631
        %1026 = vmatmul.mubr.bf16.gmra.mrb[0].mxu0 %v630
        %v1027 = vpop.f32.mrb[0].mxu0
        %v1028 = vadd.f32 0.0, %v1027
        %v1029 = vpop.f32.mrb[0].mxu0
        %v1030 = vpop.f32.mrb[0].mxu0
        %v1031 = vpop.f32.mrb[0].mxu0
        %1032 = vdwg.mxu0
        %1033 = vst [vmem:[#allocation3] sm:$0xff] %v987
        %1034 = vst [vmem:[#allocation3 + $0x8] sm:$0xff] %v989
        %1035 = vst [vmem:[#allocation3 + $0x10] sm:$0xff] %v1028
      $region76: #{tpu_custom_call.1} parent=69 // pred_fallthru
        _
    $region70: #{tpu_custom_call.1} parent=1 // loop_footer
      %s151 = sadd.s32 1, %s147
    $region71: #{tpu_custom_call.1} parent=1 // loop_footer_branch
      %146 = sbr.rel target = $region67
    $region72: #{tpu_custom_call.1} parent=1 // loop_exit
      _
    // Predicated region
    $region77: #{tpu_custom_call.1} parent=1 // pred_check
      _
    $region78: #{tpu_custom_call.1} parent=1 // pred_check_branch
      %1037 = sbr.rel (0) target = $region80
    $region79: #{tpu_custom_call.1} parent=1 // pred_region
      %s1039 = ssub.s32 1024, 1024
      %1040 = vsyncadd [#allocation8], %s1039
      %s1041 = sshll.u32 [#allocation18], 4
      %s1042 = int_to_ptr.vmem [resolvable:$true] %s1041
      %1047 = dma.vmem_to_hbm [thread:$0]  %s1042, 1024, %s10, [#allocation8], 256, 256, 16
    $region80: #{tpu_custom_call.1} parent=1 // pred_fallthru
      _
    // Predicated region
    $region81: #{tpu_custom_call.1} parent=1 // pred_check
      _
    $region82: #{tpu_custom_call.1} parent=1 // pred_check_branch
      %1049 = sbr.rel (0) target = $region84
    $region83: #{tpu_custom_call.1} parent=1 // pred_region
      %1050 = dma.done [#allocation8], 1024
    $region84: #{tpu_custom_call.1} parent=1 // pred_fallthru
      _
    %1051 = vsyncpa [#allocation7], 1
    %1052 = vsyncpa [#allocation10], 1
    %1053 = vsyncpa [#allocation13], 1
    %1054 = vsyncpa [#allocation16], 1
    %1055 = vsyncpa [#allocation8], 1

</llo_original>
